<compile_context>
chip_gen: v6e
topology: v6e:2x2x1
jax: 0.10.0
libtpu: 0.0.40
codegen_flags: <defaults>
</compile_context>

<pallas_src>
import math

import jax
import jax.numpy as jnp
from jax import lax
from jax.experimental import pallas as pl
from jax.experimental.pallas import tpu as pltpu


def _repeat_interleave_kernel(x_ref, o_ref):
    """out[m, n*R + k] = x[m, n]  for k in [0, R).

    One-hot expansion matmul on the MXU: out = x @ S where
    S[n, j] = 1  iff  n*R <= j < (n+1)*R   (equivalent to j // R == n).
    Single full-slab, lane-dense store of the output block.
    """
    x = x_ref[...]                                  # (TM, TN)
    tn = x.shape[-1]
    tnr = o_ref.shape[-1]
    r = tnr // tn
    j = lax.broadcasted_iota(jnp.int32, (tn, tnr), 1)
    n = lax.broadcasted_iota(jnp.int32, (tn, tnr), 0)
    sel = ((j >= n * r) & (j < (n + 1) * r)).astype(x.dtype)   # (TN, TN*R)
    o_ref[...] = jnp.dot(
        x, sel, preferred_element_type=jnp.float32
    ).astype(o_ref.dtype)


def repeat_interleave(x: jax.Array, repeat: int, dim: int = -1,
                      *, row_block: int = 256, col_block: int = 256) -> jax.Array:
    """Pallas TPU equivalent of torch.Tensor.repeat_interleave(repeat, dim)."""
    if repeat == 1:
        return x

    ndim = x.ndim
    dim = dim % ndim
    moved = dim != ndim - 1
    if moved:                       # put the repeated axis on the lane (last) dim
        x = jnp.moveaxis(x, dim, -1)

    lead = x.shape[:-1]
    n = x.shape[-1]
    m = math.prod(lead) if lead else 1
    x2 = x.reshape(m, n)

    # Tile sizes: full array dims when small (always legal), else multiples of
    # (8, 128) so the BlockSpec tiling constraint is satisfied.
    tm = m if m <= row_block else row_block
    tn = n if n <= col_block else col_block
    grid = (pl.cdiv(m, tm), pl.cdiv(n, tn))

    out2 = pl.pallas_call(
        _repeat_interleave_kernel,
        out_shape=jax.ShapeDtypeStruct((m, n * repeat), x.dtype),
        grid_spec=pltpu.PrefetchScalarGridSpec(
            num_scalar_prefetch=0,
            grid=grid,
            in_specs=[pl.BlockSpec((tm, tn), lambda i, j: (i, j))],
            out_specs=pl.BlockSpec((tm, tn * repeat), lambda i, j: (i, j)),
        ),
        compiler_params=pltpu.CompilerParams(
            dimension_semantics=("parallel", "parallel"),
        ),
    )(x2)

    out = out2.reshape(*lead, n * repeat)
    if moved:
        out = jnp.moveaxis(out, -1, dim)
    return out


if __name__ == "__main__":
    key = jax.random.PRNGKey(0)

    # Small demo shapes; last dim chosen so the kernel's output block is a
    # lane-dense 128-wide slab (per the performance feedback).
    B, C, H, W = 2, 4, 8, 64
    REPEAT = 2
    DIM = -1

    x = jax.random.normal(key, (B, C, H, W), dtype=jnp.float32)

    out = repeat_interleave(x, REPEAT, DIM)
    out = jax.block_until_ready(out)

    # Reference: jnp.repeat == torch.repeat_interleave for scalar repeats.
    ref = jnp.repeat(x, REPEAT, axis=DIM)
    assert out.shape == (B, C, H, W * REPEAT)
    assert jnp.allclose(out, ref), "mismatch vs reference repeat_interleave"

    print("KERNEL_OK")
</pallas_src>

<mosaic_0001>
module attributes {stable_mosaic.version = 11 : i64} {
  func.func @_repeat_interleave_kernel(%arg0: i32, %arg1: i32, %arg2: memref<64x64xf32, #tpu.memory_space<vmem>>, %arg3: memref<64x128xf32, #tpu.memory_space<vmem>>) attributes {dimension_semantics = [#tpu.dimension_semantics<parallel>, #tpu.dimension_semantics<parallel>], iteration_bounds = array<i64: 1, 1>, scalar_prefetch = 0 : i64, scratch_operands = 0 : i64, tpu.core_type = #tpu.core_type<tc>, window_params = [{transform_indices = @transform_0, window_bounds = array<i64: 64, 64>}, {transform_indices = @transform_1, window_bounds = array<i64: 64, 128>}]} {
    %c0 = arith.constant 0 : index
    %c0_0 = arith.constant 0 : index
    %0 = vector.load %arg2[%c0, %c0_0] : memref<64x64xf32, #tpu.memory_space<vmem>>, vector<64x64xf32>
    %1 = tpu.iota {dimensions = array<i32: 1>} : vector<64x128xi32>
    %2 = tpu.iota {dimensions = array<i32: 0>} : vector<64x128xi32>
    %c2_i32 = arith.constant 2 : i32
    %3 = vector.broadcast %c2_i32 : i32 to vector<64x128xi32>
    %4 = arith.muli %2, %3 : vector<64x128xi32>
    %5 = arith.cmpi sge, %1, %4 : vector<64x128xi32>
    %c1_i32 = arith.constant 1 : i32
    %6 = vector.broadcast %c1_i32 : i32 to vector<64x128xi32>
    %7 = arith.addi %2, %6 : vector<64x128xi32>
    %c2_i32_1 = arith.constant 2 : i32
    %8 = vector.broadcast %c2_i32_1 : i32 to vector<64x128xi32>
    %9 = arith.muli %7, %8 : vector<64x128xi32>
    %10 = arith.cmpi slt, %1, %9 : vector<64x128xi32>
    %11 = arith.andi %5, %10 : vector<64x128xi1>
    %12 = arith.extui %11 : vector<64x128xi1> to vector<64x128xi32>
    %13 = arith.sitofp %12 : vector<64x128xi32> to vector<64x128xf32>
    %cst = arith.constant dense<0.000000e+00> : vector<64x128xf32>
    %14 = tpu.matmul %0, %13, %cst {dimension_numbers = #tpu.dot_dimension_numbers<[1], [0], [0], [1], [0, 0, 1, 1], [], []>} : vector<64x64xf32>, vector<64x128xf32>, vector<64x128xf32> -> vector<64x128xf32>
    %c0_2 = arith.constant 0 : index
    %c0_3 = arith.constant 0 : index
    %15 = vector.load %arg3[%c0_2, %c0_3] : memref<64x128xf32, #tpu.memory_space<vmem>>, vector<64x128xf32>
    tpu.vector_store %arg3[%c0_2, %c0_3], %14 {strides = array<i32>} : memref<64x128xf32, #tpu.memory_space<vmem>>, vector<64x128xf32>,
    return
  }
  func.func @transform_0(%arg0: i32, %arg1: i32) -> (i32, i32) {
    %c0_i32 = arith.constant 0 : i32
    return %arg0, %arg1 : i32, i32
  }
  func.func @transform_1(%arg0: i32, %arg1: i32) -> (i32, i32) {
    %c0_i32 = arith.constant 0 : i32
    return %arg0, %arg1 : i32, i32
  }
}

</mosaic_0001>

<llo_original>
// kernel: tpu_custom_call.1
$region0: #{tpu_custom_call.1}
  #allocation0 [shape = 'u32[]', space=smem, size = 0x4, offset = 0x4, fixed_abs, tag = 'smem constant byte address 0x4 - core index']
  #allocation1 [shape = 'u32[144,128]{1,0:T(1,128)}', space=vmem, size = 0x12000, scoped, tag = 'internal scratch']
  %s0 = inlined_call_operand.hbm [shape: f32[64,64], index: 0, kind: input, shape index: {}]
  %s1 = inlined_call_operand.hbm [shape: f32[64,128], index: 1, kind: output, shape index: {}]
  %s2 = sld [smem:[#allocation0]]
  $region18: #{tpu_custom_call.1} parent=0
    _
  %s4 = ssub.s32 1, %s2
  %s5 = scalar_select 0, %s4, %s2
  $region1: #{tpu_custom_call.1} parent=0
    #allocation2 [shape = 'u8[32768]{0}', space=vmem, size = 0x8000, scoped, tag = 'input window, operand 0, single buffered']
    #allocation3 [shape = 's32[1]{0}', space=sflag, size = 0x4, scoped, tag = 'scoped memory for tpu_custom_call.1']
    #allocation4 [shape = 's32[1]{0}', space=sflag, size = 0x4, scoped, tag = 'scoped memory for tpu_custom_call.1']
    #allocation5 [shape = 'u8[32768]{0}', space=vmem, size = 0x8000, scoped, tag = 'output window, operand 0, single buffered']
    %6 = vsyncpa [#allocation3], 0
    %7 = vsyncpa [#allocation4], 0
    // Predicated region
    $region2: #{tpu_custom_call.1} parent=1 // pred_check
      _
    $region3: #{tpu_custom_call.1} parent=1 // pred_check_branch
      %9 = sbr.rel (0) target = $region5
    $region4: #{tpu_custom_call.1} parent=1 // pred_region
      %s11 = ssub.s32 1024, 1024
      %12 = vsyncadd [#allocation3], %s11
      %s13 = sshll.u32 [#allocation2], 4
      %s14 = int_to_ptr.vmem [resolvable:$true] %s13
      %19 = dma.hbm_to_vmem [thread:$0]  %s0, 1024, %s14, [#allocation3], 128, 128, 8
    $region5: #{tpu_custom_call.1} parent=1 // pred_fallthru
      _
    // Predicated region
    $region6: #{tpu_custom_call.1} parent=1 // pred_check
      _
    $region7: #{tpu_custom_call.1} parent=1 // pred_check_branch
      %21 = sbr.rel (0) target = $region9
    $region8: #{tpu_custom_call.1} parent=1 // pred_region
      %22 = dma.done [#allocation3], 1024
    $region9: #{tpu_custom_call.1} parent=1 // pred_fallthru
      _
    %v23 = vld [vmem:[#allocation2] sm:$0xff]
    %v24 = vld [vmem:[#allocation2 + $0x8] sm:$0xff]
    %v25 = vld [vmem:[#allocation2 + $0x10] sm:$0xff]
    %v26 = vld [vmem:[#allocation2 + $0x18] sm:$0xff]
    %v27 = vld [vmem:[#allocation2 + $0x20] sm:$0xff]
    %v28 = vld [vmem:[#allocation2 + $0x28] sm:$0xff]
    %v29 = vld [vmem:[#allocation2 + $0x30] sm:$0xff]
    %v30 = vld [vmem:[#allocation2 + $0x38] sm:$0xff]
    %v31 = vlaneseq
    %v32 = vand.u32 %v31, 127
    %v33 = vlaneseq
    %v34 = vshrl.u32 %v33, 7
    %v35 = vadd.s32 %v34, 8
    %v36 = vadd.s32 %v34, 16
    %v37 = vadd.s32 %v34, 24
    %v38 = vadd.s32 %v34, 32
    %v39 = vadd.s32 %v34, 40
    %v40 = vadd.s32 %v34, 48
    %v41 = vadd.s32 %v34, 56
    %v42 = vmul.u32 %v34, 2
    %v43 = vmul.u32 %v35, 2
    %v44 = vmul.u32 %v36, 2
    %v45 = vmul.u32 %v37, 2
    %v46 = vmul.u32 %v38, 2
    %v47 = vmul.u32 %v39, 2
    %v48 = vmul.u32 %v40, 2
    %v49 = vmul.u32 %v41, 2
    %vm50 = vcmp.ge.s32.totalorder %v32, %v42
    %vm51 = vcmp.ge.s32.totalorder %v32, %v43
    %vm52 = vcmp.ge.s32.totalorder %v32, %v44
    %vm53 = vcmp.ge.s32.totalorder %v32, %v45
    %vm54 = vcmp.ge.s32.totalorder %v32, %v46
    %vm55 = vcmp.ge.s32.totalorder %v32, %v47
    %vm56 = vcmp.ge.s32.totalorder %v32, %v48
    %vm57 = vcmp.ge.s32.totalorder %v32, %v49
    %v58 = vadd.s32 %v34, 1
    %v59 = vadd.s32 %v35, 1
    %v60 = vadd.s32 %v36, 1
    %v61 = vadd.s32 %v37, 1
    %v62 = vadd.s32 %v38, 1
    %v63 = vadd.s32 %v39, 1
    %v64 = vadd.s32 %v40, 1
    %v65 = vadd.s32 %v41, 1
    %v66 = vmul.u32 %v58, 2
    %v67 = vmul.u32 %v59, 2
    %v68 = vmul.u32 %v60, 2
    %v69 = vmul.u32 %v61, 2
    %v70 = vmul.u32 %v62, 2
    %v71 = vmul.u32 %v63, 2
    %v72 = vmul.u32 %v64, 2
    %v73 = vmul.u32 %v65, 2
    %vm74 = vcmp.lt.s32.totalorder %v32, %v66
    %vm75 = vcmp.lt.s32.totalorder %v32, %v67
    %vm76 = vcmp.lt.s32.totalorder %v32, %v68
    %vm77 = vcmp.lt.s32.totalorder %v32, %v69
    %vm78 = vcmp.lt.s32.totalorder %v32, %v70
    %vm79 = vcmp.lt.s32.totalorder %v32, %v71
    %vm80 = vcmp.lt.s32.totalorder %v32, %v72
    %vm81 = vcmp.lt.s32.totalorder %v32, %v73
    %vm82 = vmand %vm50, %vm74
    %vm83 = vmand %vm51, %vm75
    %vm84 = vmand %vm52, %vm76
    %vm85 = vmand %vm53, %vm77
    %vm86 = vmand %vm54, %vm78
    %vm87 = vmand %vm55, %vm79
    %vm88 = vmand %vm56, %vm80
    %vm89 = vmand %vm57, %vm81
    %v90 = vsel %vm82, 1, 0
    %v91 = vsel %vm83, 1, 0
    %v92 = vsel %vm84, 1, 0
    %v93 = vsel %vm85, 1, 0
    %v94 = vsel %vm86, 1, 0
    %v95 = vsel %vm87, 1, 0
    %v96 = vsel %vm88, 1, 0
    %v97 = vsel %vm89, 1, 0
    %v98 = vcvt.s32.f32 %v90
    %v99 = vcvt.s32.f32 %v91
    %v100 = vcvt.s32.f32 %v92
    %v101 = vcvt.s32.f32 %v93
    %v102 = vcvt.s32.f32 %v94
    %v103 = vcvt.s32.f32 %v95
    %v104 = vcvt.s32.f32 %v96
    %v105 = vcvt.s32.f32 %v97
    %vm106 = vcmask 523264
    %v108 = vsel %vm106, %v23, 0
    %v111 = vsel %vm106, %v24, 0
    %v114 = vsel %vm106, %v25, 0
    %v117 = vsel %vm106, %v26, 0
    %v120 = vsel %vm106, %v27, 0
    %v123 = vsel %vm106, %v28, 0
    %v126 = vsel %vm106, %v29, 0
    %v129 = vsel %vm106, %v30, 0
    %131 = vmatprep.subr.mxu0 0.0
    %132 = vmatpush1.msra.mxu0 0.0
    %133 = vmatprep.subr.mxu0 0.0
    %134 = vmatpush1.msra.mxu0 0.0
    %135 = vmatprep.subr.mxu0 0.0
    %136 = vmatpush1.msra.mxu0 0.0
    %137 = vmatprep.subr.mxu0 0.0
    %138 = vmatpush1.msra.mxu0 0.0
    %139 = vmatprep.subr.mxu0 0.0
    %140 = vmatpush1.msra.mxu0 0.0
    %141 = vmatprep.subr.mxu0 0.0
    %142 = vmatpush1.msra.mxu0 0.0
    %143 = vmatprep.subr.mxu0 0.0
    %144 = vmatpush1.msra.mxu0 0.0
    %145 = vmatprep.subr.mxu0 0.0
    %146 = vmatpush1.msra.mxu0 0.0
    %147 = vmatprep.subr.mxu0 0.0
    %148 = vmatpush1.msra.mxu0 %v105
    %149 = vmatprep.subr.mxu0 0.0
    %150 = vmatpush1.msra.mxu0 %v104
    %151 = vmatprep.subr.mxu0 0.0
    %152 = vmatpush1.msra.mxu0 %v103
    %153 = vmatprep.subr.mxu0 0.0
    %154 = vmatpush1.msra.mxu0 %v102
    %155 = vmatprep.subr.mxu0 0.0
    %156 = vmatpush1.msra.mxu0 %v101
    %157 = vmatprep.subr.mxu0 0.0
    %158 = vmatpush1.msra.mxu0 %v100
    %159 = vmatprep.subr.mxu0 0.0
    %160 = vmatpush1.msra.mxu0 %v99
    %161 = vmatprep.subr.mxu0 0.0
    %162 = vmatpush1.msra.mxu0 %v98
    %163 = vmatprep.subr.mxu0 0.0
    %164 = vmatpush2.msra.mxu0 0.0
    %165 = vmatprep.subr.mxu0 0.0
    %166 = vmatpush2.msra.mxu0 0.0
    %167 = vmatprep.subr.mxu0 0.0
    %168 = vmatpush2.msra.mxu0 0.0
    %169 = vmatprep.subr.mxu0 0.0
    %170 = vmatpush2.msra.mxu0 0.0
    %171 = vmatprep.subr.mxu0 0.0
    %172 = vmatpush2.msra.mxu0 0.0
    %173 = vmatprep.subr.mxu0 0.0
    %174 = vmatpush2.msra.mxu0 0.0
    %175 = vmatprep.subr.mxu0 0.0
    %176 = vmatpush2.msra.mxu0 0.0
    %177 = vmatprep.subr.mxu0 0.0
    %178 = vmatpush2.msra.mxu0 0.0
    %179 = vmatprep.subr.mxu0 0.0
    %180 = vmatpush2.msra.mxu0 0.0
    %181 = vmatprep.subr.mxu0 0.0
    %182 = vmatpush2.msra.mxu0 0.0
    %183 = vmatprep.subr.mxu0 0.0
    %184 = vmatpush2.msra.mxu0 0.0
    %185 = vmatprep.subr.mxu0 0.0
    %186 = vmatpush2.msra.mxu0 0.0
    %187 = vmatprep.subr.mxu0 0.0
    %188 = vmatpush2.msra.mxu0 0.0
    %189 = vmatprep.subr.mxu0 0.0
    %190 = vmatpush2.msra.mxu0 0.0
    %191 = vmatprep.subr.mxu0 0.0
    %192 = vmatpush2.msra.mxu0 0.0
    %193 = vmatprep.subr.mxu0 0.0
    %194 = vmatpush2.msra.mxu0 0.0
    %195 = vmatprep.mubr.f32.mxu0 0.0
    %196 = vmatmul.mubr.f32.gmra.mxu0 %v108
    %v197 = vpop.f32.mrf.mxu0
    %v198 = vadd.f32 0.0, %v197
    %v199 = vpop.f32.mrf.mxu0
    %200 = vmatprep.mubr.f32.mxu0 0.0
    %201 = vmatmul.mubr.f32.gmra.mxu0 %v111
    %v202 = vpop.f32.mrf.mxu0
    %v203 = vadd.f32 0.0, %v202
    %v204 = vpop.f32.mrf.mxu0
    %205 = vmatprep.mubr.f32.mxu0 0.0
    %206 = vmatmul.mubr.f32.gmra.mxu0 %v114
    %v207 = vpop.f32.mrf.mxu0
    %v208 = vadd.f32 0.0, %v207
    %v209 = vpop.f32.mrf.mxu0
    %210 = vmatprep.mubr.f32.mxu0 0.0
    %211 = vmatmul.mubr.f32.gmra.mxu0 %v117
    %v212 = vpop.f32.mrf.mxu0
    %v213 = vadd.f32 0.0, %v212
    %v214 = vpop.f32.mrf.mxu0
    %215 = vmatprep.mubr.f32.mxu0 0.0
    %216 = vmatmul.mubr.f32.gmra.mxu0 %v120
    %v217 = vpop.f32.mrf.mxu0
    %v218 = vadd.f32 0.0, %v217
    %v219 = vpop.f32.mrf.mxu0
    %220 = vmatprep.mubr.f32.mxu0 0.0
    %221 = vmatmul.mubr.f32.gmra.mxu0 %v123
    %v222 = vpop.f32.mrf.mxu0
    %v223 = vadd.f32 0.0, %v222
    %v224 = vpop.f32.mrf.mxu0
    %225 = vmatprep.mubr.f32.mxu0 0.0
    %226 = vmatmul.mubr.f32.gmra.mxu0 %v126
    %v227 = vpop.f32.mrf.mxu0
    %v228 = vadd.f32 0.0, %v227
    %v229 = vpop.f32.mrf.mxu0
    %230 = vmatprep.mubr.f32.mxu0 0.0
    %231 = vmatmul.mubr.f32.gmra.mxu0 %v129
    %v232 = vpop.f32.mrf.mxu0
    %v233 = vadd.f32 0.0, %v232
    %v234 = vpop.f32.mrf.mxu0
    %235 = vdwg.mxu0
    %236 = vst [vmem:[#allocation5] sm:$0xff] %v198
    %237 = vst [vmem:[#allocation5 + $0x8] sm:$0xff] %v203
    %238 = vst [vmem:[#allocation5 + $0x10] sm:$0xff] %v208
    %239 = vst [vmem:[#allocation5 + $0x18] sm:$0xff] %v213
    %240 = vst [vmem:[#allocation5 + $0x20] sm:$0xff] %v218
    %241 = vst [vmem:[#allocation5 + $0x28] sm:$0xff] %v223
    %242 = vst [vmem:[#allocation5 + $0x30] sm:$0xff] %v228
    %243 = vst [vmem:[#allocation5 + $0x38] sm:$0xff] %v233
    // Predicated region
    $region10: #{tpu_custom_call.1} parent=1 // pred_check
      _
    $region11: #{tpu_custom_call.1} parent=1 // pred_check_branch
      %245 = sbr.rel (0) target = $region13
    $region12: #{tpu_custom_call.1} parent=1 // pred_region
      %s247 = ssub.s32 1024, 1024
      %248 = vsyncadd [#allocation4], %s247
      %s249 = sshll.u32 [#allocation5], 4
      %s250 = int_to_ptr.vmem [resolvable:$true] %s249
      %255 = dma.vmem_to_hbm [thread:$0]  %s250, 1024, %s1, [#allocation4], 128, 128, 8
    $region13: #{tpu_custom_call.1} parent=1 // pred_fallthru
      _
    // Predicated region
    $region14: #{tpu_custom_call.1} parent=1 // pred_check
      _
    $region15: #{tpu_custom_call.1} parent=1 // pred_check_branch
      %257 = sbr.rel (0) target = $region17
    $region16: #{tpu_custom_call.1} parent=1 // pred_region
      %258 = dma.done [#allocation4], 1024
    $region17: #{tpu_custom_call.1} parent=1 // pred_fallthru
      _
    %259 = vsyncpa [#allocation3], 1
    %260 = vsyncpa [#allocation4], 1

</llo_original>
